<compile_context>
chip_gen: v7x
topology: tpu7x:2x2x1
jax: 0.10.0
libtpu: 0.0.40
codegen_flags: <defaults>
</compile_context>

<pallas_src>
import jax
import jax.numpy as jnp
from jax.experimental import pallas as pl
from jax.experimental.pallas import tpu as pltpu


O_PAD = 128  # W3 output columns zero-padded to a full lane width for the MXU


def _predictor_kernel(x_ref, w1_ref, b1_ref, w2_ref, b2_ref, w3_ref, b3_ref,
                      out_ref):
    """Fused MLP: 3 bf16 MXU matmuls, f32 bias/ReLU, 2-lane f32 log_softmax."""
    # In-kernel cast of the f32 input tile to bf16 (VPU work, hidden under DMA).
    x = x_ref[...].astype(jnp.bfloat16)

    # Layer 1: (TB, D)bf16 @ (D, 128)bf16 -> f32 acc, bias + ReLU in f32.
    h1 = jnp.dot(x, w1_ref[...], preferred_element_type=jnp.float32)
    h1 = jnp.maximum(h1 + b1_ref[...], 0.0)
    # (Dropout(0.2): identity in eval mode.)

    # Layer 2: (TB, 128) @ (128, 64)
    h2 = jnp.dot(h1.astype(jnp.bfloat16), w2_ref[...],
                 preferred_element_type=jnp.float32)
    h2 = jnp.maximum(h2 + b2_ref[...], 0.0)

    # Layer 3: (TB, 64) @ (64, 128-padded).  Padded columns have zero weights;
    # only the first O real lanes are kept.
    logits_pad = jnp.dot(h2.astype(jnp.bfloat16), w3_ref[...],
                         preferred_element_type=jnp.float32)
    n_out = b3_ref.shape[1]                       # static (== 2)
    logits = logits_pad[:, :n_out] + b3_ref[...]

    # Numerically-stable log_softmax over the 2 real classes (f32).
    m = jnp.max(logits, axis=-1, keepdims=True)
    shifted = logits - m
    lse = jnp.log(jnp.sum(jnp.exp(shifted), axis=-1, keepdims=True))
    out_ref[...] = (shifted - lse).astype(out_ref.dtype)


def _select_block_b(B):
    """Batch tile: full batch for small B; otherwise a multiple-of-8 tile that
    is <= 512 rows and yields >= 2 grid steps (so both v7x TCs get work)."""
    if B <= 256:
        return B                                  # single full-dim tile (legal)
    half = -(-B // 2)                             # cdiv(B, 2)
    blk = min(512, ((half + 7) // 8) * 8)         # sublane-aligned, >=2 steps
    return blk


def prepare_params(params):
    """One-time weight preprocessing (hoisted out of the per-call jit path).

    Returns bf16 MXU weights (W3 zero-padded to 128 output lanes) and f32
    row-vector biases (b3 kept at its real width of 2)."""
    w1, b1, w2, b2, w3, b3 = params
    H2, O = w3.shape
    w3p = jnp.zeros((H2, O_PAD), jnp.float32).at[:, :O].set(
        w3.astype(jnp.float32))
    return (
        w1.astype(jnp.bfloat16),
        b1.astype(jnp.float32).reshape(1, -1),
        w2.astype(jnp.bfloat16),
        b2.astype(jnp.float32).reshape(1, -1),
        w3p.astype(jnp.bfloat16),
        b3.astype(jnp.float32).reshape(1, -1),
    )


@jax.jit
def predictor_forward(code_P, prepared_params):
    """Runs the fused Predictor forward pass as a single Pallas kernel."""
    w1b, b1f, w2b, b2f, w3b, b3f = prepared_params
    B, D = code_P.shape
    H1 = w1b.shape[1]     # 128
    H2 = w2b.shape[1]     # 64
    O = b3f.shape[1]      # 2

    blk = _select_block_b(B)
    grid = (pl.cdiv(B, blk),)

    # VMEM budget: double-buffered f32 x tile + (tiny) f32 out tile, resident
    # weights, and the in-kernel f32/bf16 intermediates.  Capped at 48 MiB so
    # there is headroom under v7x's 64 MiB physical VMEM.
    weight_bytes = (D * H1 + H1 * H2 + H2 * O_PAD) * 2 + (H1 + H2 + O) * 4
    io_bytes = 2 * blk * D * 4 + 2 * blk * O * 4
    interm_bytes = blk * (H1 + H2 + O_PAD) * 4 + blk * (D + H1 + H2) * 2
    vmem_need = 2 * weight_bytes + io_bytes + interm_bytes
    vmem_limit = int(min(48 * 1024 * 1024,
                         max(32 * 1024 * 1024, vmem_need + (16 << 20))))

    cost = pl.CostEstimate(
        flops=2 * B * (D * H1 + H1 * H2 + H2 * O_PAD),
        transcendentals=B * O,                      # exp in 2-lane log_softmax
        bytes_accessed=B * D * 4 + weight_bytes + B * O * 4,
    )

    # NOTE: weight/bias index maps are constant so their blocks stay VMEM-
    # resident across grid steps; at these sizes single-buffering them
    # (pl.Buffered(1)) would save <100 KiB, so default buffering is kept for
    # lowering robustness.
    return pl.pallas_call(
        _predictor_kernel,
        out_shape=jax.ShapeDtypeStruct((B, O), jnp.float32),
        grid_spec=pltpu.PrefetchScalarGridSpec(
            num_scalar_prefetch=0,
            grid=grid,
            in_specs=[
                pl.BlockSpec((blk, D), lambda i: (i, 0)),       # x tile (f32)
                pl.BlockSpec((D, H1), lambda i: (0, 0)),        # W1 (bf16)
                pl.BlockSpec((1, H1), lambda i: (0, 0)),        # b1 (f32)
                pl.BlockSpec((H1, H2), lambda i: (0, 0)),       # W2 (bf16)
                pl.BlockSpec((1, H2), lambda i: (0, 0)),        # b2 (f32)
                pl.BlockSpec((H2, O_PAD), lambda i: (0, 0)),    # W3 padded
                pl.BlockSpec((1, O), lambda i: (0, 0)),         # b3 (f32, 2)
            ],
            out_specs=pl.BlockSpec((blk, O), lambda i: (i, 0)), # dense (B,2)
        ),
        compiler_params=pltpu.CompilerParams(
            dimension_semantics=("parallel",),
            vmem_limit_bytes=vmem_limit,
        ),
        cost_estimate=cost,
    )(code_P, w1b, b1f, w2b, b2f, w3b, b3f)


def init_params(key, input_dim):
    """Deterministic parameter init mirroring the nn.Linear shapes.

    Stored as [in, out] (transposed w.r.t. torch's [out, in]) for x @ W."""
    ks = jax.random.split(key, 6)

    def linear(kw, kb, fan_in, fan_out):
        bound = 1.0 / jnp.sqrt(fan_in)
        w = jax.random.uniform(kw, (fan_in, fan_out), jnp.float32, -bound, bound)
        b = jax.random.uniform(kb, (1, fan_out), jnp.float32, -bound, bound)
        return w, b

    w1, b1 = linear(ks[0], ks[1], input_dim, 128)
    w2, b2 = linear(ks[2], ks[3], 128, 64)
    w3, b3 = linear(ks[4], ks[5], 64, 2)
    return (w1, b1, w2, b2, w3, b3)


def predictor_reference_f32(code_P, params):
    """Pure-JAX f32 reference (true PyTorch-module semantics, eval mode)."""
    w1, b1, w2, b2, w3, b3 = params
    h1 = jnp.maximum(code_P @ w1 + b1, 0.0)
    h2 = jnp.maximum(h1 @ w2 + b2, 0.0)
    logits = h2 @ w3 + b3
    return jax.nn.log_softmax(logits, axis=-1)


def predictor_reference_bf16(code_P, params):
    """Pure-JAX reference mirroring the kernel's bf16-MXU / f32-accum math."""
    w1, b1, w2, b2, w3, b3 = params

    def mm(a, w):
        return jnp.dot(a.astype(jnp.bfloat16), w.astype(jnp.bfloat16),
                       preferred_element_type=jnp.float32)

    h1 = jnp.maximum(mm(code_P, w1) + b1, 0.0)
    h2 = jnp.maximum(mm(h1, w2) + b2, 0.0)
    logits = mm(h2, w3) + b3
    return jax.nn.log_softmax(logits, axis=-1)


if __name__ == "__main__":
    key = jax.random.PRNGKey(0)
    k_x, k_p = jax.random.split(key)

    batch = 16
    code_P_dim = 32  # args['code_P_dim']

    code_P = jax.random.normal(k_x, (batch, code_P_dim), dtype=jnp.float32)
    params = init_params(k_p, code_P_dim)
    prepared = prepare_params(params)          # one-time weight prep

    out = predictor_forward(code_P, prepared)
    out = jax.block_until_ready(out)

    assert out.shape == (batch, 2)

    # Bit-level check against a reference that mirrors the kernel's bf16 MXU /
    # f32 accumulate numerics.
    ref_bf16 = predictor_reference_bf16(code_P, params)
    assert jnp.allclose(out, ref_bf16, atol=2e-3, rtol=2e-3), \
        "mismatch vs bf16-matched reference"

    # Fidelity check against the true f32 module semantics (loose tolerance
    # accounting for bf16 MXU operands).
    ref_f32 = predictor_reference_f32(code_P, params)
    assert jnp.allclose(out, ref_f32, atol=5e-2, rtol=0.0), \
        "mismatch vs f32 reference"

    print("KERNEL_OK")
</pallas_src>

<mosaic_0001>
module attributes {stable_mosaic.version = 11 : i64} {
  func.func @_predictor_kernel(%arg0: i32, %arg1: memref<16x32xf32, #tpu.memory_space<vmem>>, %arg2: memref<32x128xbf16, #tpu.memory_space<vmem>>, %arg3: memref<1x128xf32, #tpu.memory_space<vmem>>, %arg4: memref<128x64xbf16, #tpu.memory_space<vmem>>, %arg5: memref<1x64xf32, #tpu.memory_space<vmem>>, %arg6: memref<64x128xbf16, #tpu.memory_space<vmem>>, %arg7: memref<1x2xf32, #tpu.memory_space<vmem>>, %arg8: memref<16x2xf32, #tpu.memory_space<vmem>>) attributes {dimension_semantics = [#tpu.dimension_semantics<parallel>], iteration_bounds = array<i64: 1>, scalar_prefetch = 0 : i64, scratch_operands = 0 : i64, tpu.core_type = #tpu.core_type<tc>, window_params = [{transform_indices = @transform_0, window_bounds = array<i64: 16, 32>}, {pipeline_mode = #tpu.pipeline_mode<synchronous>, transform_indices = @transform_1, window_bounds = array<i64: 32, 128>}, {pipeline_mode = #tpu.pipeline_mode<synchronous>, transform_indices = @transform_2, window_bounds = array<i64: 1, 128>}, {pipeline_mode = #tpu.pipeline_mode<synchronous>, transform_indices = @transform_3, window_bounds = array<i64: 128, 64>}, {pipeline_mode = #tpu.pipeline_mode<synchronous>, transform_indices = @transform_4, window_bounds = array<i64: 1, 64>}, {pipeline_mode = #tpu.pipeline_mode<synchronous>, transform_indices = @transform_5, window_bounds = array<i64: 64, 128>}, {pipeline_mode = #tpu.pipeline_mode<synchronous>, transform_indices = @transform_6, window_bounds = array<i64: 1, 2>}, {transform_indices = @transform_7, window_bounds = array<i64: 16, 2>}]} {
    %c0 = arith.constant 0 : index
    %c0_0 = arith.constant 0 : index
    %0 = vector.load %arg1[%c0, %c0_0] : memref<16x32xf32, #tpu.memory_space<vmem>>, vector<16x32xf32>
    %1 = arith.truncf %0 : vector<16x32xf32> to vector<16x32xbf16>
    %c0_1 = arith.constant 0 : index
    %c0_2 = arith.constant 0 : index
    %2 = vector.load %arg2[%c0_1, %c0_2] : memref<32x128xbf16, #tpu.memory_space<vmem>>, vector<32x128xbf16>
    %cst = arith.constant dense<0.000000e+00> : vector<16x128xf32>
    %3 = tpu.matmul %1, %2, %cst {dimension_numbers = #tpu.dot_dimension_numbers<[1], [0], [0], [1], [0, 0, 1, 1], [], []>} : vector<16x32xbf16>, vector<32x128xbf16>, vector<16x128xf32> -> vector<16x128xf32>
    %c0_3 = arith.constant 0 : index
    %c0_4 = arith.constant 0 : index
    %4 = vector.load %arg3[%c0_3, %c0_4] : memref<1x128xf32, #tpu.memory_space<vmem>>, vector<1x128xf32>
    %5 = vector.broadcast %4 : vector<1x128xf32> to vector<16x128xf32>
    %6 = arith.addf %3, %5 : vector<16x128xf32>
    %cst_5 = arith.constant 0.000000e+00 : f32
    %7 = vector.broadcast %cst_5 : f32 to vector<16x128xf32>
    %8 = arith.maximumf %6, %7 : vector<16x128xf32>
    %9 = arith.truncf %8 : vector<16x128xf32> to vector<16x128xbf16>
    %c0_6 = arith.constant 0 : index
    %c0_7 = arith.constant 0 : index
    %10 = vector.load %arg4[%c0_6, %c0_7] : memref<128x64xbf16, #tpu.memory_space<vmem>>, vector<128x64xbf16>
    %cst_8 = arith.constant dense<0.000000e+00> : vector<16x64xf32>
    %11 = tpu.matmul %9, %10, %cst_8 {dimension_numbers = #tpu.dot_dimension_numbers<[1], [0], [0], [1], [0, 0, 1, 1], [], []>} : vector<16x128xbf16>, vector<128x64xbf16>, vector<16x64xf32> -> vector<16x64xf32>
    %c0_9 = arith.constant 0 : index
    %c0_10 = arith.constant 0 : index
    %12 = vector.load %arg5[%c0_9, %c0_10] : memref<1x64xf32, #tpu.memory_space<vmem>>, vector<1x64xf32>
    %13 = vector.broadcast %12 : vector<1x64xf32> to vector<16x64xf32>
    %14 = arith.addf %11, %13 : vector<16x64xf32>
    %cst_11 = arith.constant 0.000000e+00 : f32
    %15 = vector.broadcast %cst_11 : f32 to vector<16x64xf32>
    %16 = arith.maximumf %14, %15 : vector<16x64xf32>
    %17 = arith.truncf %16 : vector<16x64xf32> to vector<16x64xbf16>
    %c0_12 = arith.constant 0 : index
    %c0_13 = arith.constant 0 : index
    %18 = vector.load %arg6[%c0_12, %c0_13] : memref<64x128xbf16, #tpu.memory_space<vmem>>, vector<64x128xbf16>
    %cst_14 = arith.constant dense<0.000000e+00> : vector<16x128xf32>
    %19 = tpu.matmul %17, %18, %cst_14 {dimension_numbers = #tpu.dot_dimension_numbers<[1], [0], [0], [1], [0, 0, 1, 1], [], []>} : vector<16x64xbf16>, vector<64x128xbf16>, vector<16x128xf32> -> vector<16x128xf32>
    %20 = vector.extract_strided_slice %19 {offsets = [0, 0], sizes = [16, 2], strides = [1, 1]} : vector<16x128xf32> to vector<16x2xf32>
    %c0_15 = arith.constant 0 : index
    %c0_16 = arith.constant 0 : index
    %21 = vector.load %arg7[%c0_15, %c0_16] : memref<1x2xf32, #tpu.memory_space<vmem>>, vector<1x2xf32>
    %22 = vector.broadcast %21 : vector<1x2xf32> to vector<16x2xf32>
    %23 = arith.addf %20, %22 : vector<16x2xf32>
    %cst_17 = arith.constant dense<0xFF800000> : vector<16xf32>
    %24 = vector.multi_reduction <maximumf>, %23, %cst_17 [1] : vector<16x2xf32> to vector<16xf32>
    %25 = vector.shape_cast %24 : vector<16xf32> to vector<16x1xf32>
    %26 = vector.broadcast %25 : vector<16x1xf32> to vector<16x2xf32>
    %27 = arith.subf %23, %26 : vector<16x2xf32>
    %28 = math.exp %27 : vector<16x2xf32>
    %cst_18 = arith.constant dense<0.000000e+00> : vector<16xf32>
    %29 = vector.multi_reduction <add>, %28, %cst_18 [1] : vector<16x2xf32> to vector<16xf32>
    %30 = vector.shape_cast %29 : vector<16xf32> to vector<16x1xf32>
    %31 = math.log %30 : vector<16x1xf32>
    %32 = vector.broadcast %31 : vector<16x1xf32> to vector<16x2xf32>
    %33 = arith.subf %27, %32 : vector<16x2xf32>
    %c0_19 = arith.constant 0 : index
    %c0_20 = arith.constant 0 : index
    %34 = vector.load %arg8[%c0_19, %c0_20] : memref<16x2xf32, #tpu.memory_space<vmem>>, vector<16x2xf32>
    tpu.vector_store %arg8[%c0_19, %c0_20], %33 {strides = array<i32>} : memref<16x2xf32, #tpu.memory_space<vmem>>, vector<16x2xf32>,
    return
  }
  func.func @transform_0(%arg0: i32) -> (i32, i32) {
    %c0_i32 = arith.constant 0 : i32
    %c0_i32_0 = arith.constant 0 : i32
    return %arg0, %c0_i32 : i32, i32
  }
  func.func @transform_1(%arg0: i32) -> (i32, i32) {
    %c0_i32 = arith.constant 0 : i32
    %c0_i32_0 = arith.constant 0 : i32
    %c0_i32_1 = arith.constant 0 : i32
    return %c0_i32, %c0_i32_0 : i32, i32
  }
  func.func @transform_2(%arg0: i32) -> (i32, i32) {
    %c0_i32 = arith.constant 0 : i32
    %c0_i32_0 = arith.constant 0 : i32
    %c0_i32_1 = arith.constant 0 : i32
    return %c0_i32, %c0_i32_0 : i32, i32
  }
  func.func @transform_3(%arg0: i32) -> (i32, i32) {
    %c0_i32 = arith.constant 0 : i32
    %c0_i32_0 = arith.constant 0 : i32
    %c0_i32_1 = arith.constant 0 : i32
    return %c0_i32, %c0_i32_0 : i32, i32
  }
  func.func @transform_4(%arg0: i32) -> (i32, i32) {
    %c0_i32 = arith.constant 0 : i32
    %c0_i32_0 = arith.constant 0 : i32
    %c0_i32_1 = arith.constant 0 : i32
    return %c0_i32, %c0_i32_0 : i32, i32
  }
  func.func @transform_5(%arg0: i32) -> (i32, i32) {
    %c0_i32 = arith.constant 0 : i32
    %c0_i32_0 = arith.constant 0 : i32
    %c0_i32_1 = arith.constant 0 : i32
    return %c0_i32, %c0_i32_0 : i32, i32
  }
  func.func @transform_6(%arg0: i32) -> (i32, i32) {
    %c0_i32 = arith.constant 0 : i32
    %c0_i32_0 = arith.constant 0 : i32
    %c0_i32_1 = arith.constant 0 : i32
    return %c0_i32, %c0_i32_0 : i32, i32
  }
  func.func @transform_7(%arg0: i32) -> (i32, i32) {
    %c0_i32 = arith.constant 0 : i32
    %c0_i32_0 = arith.constant 0 : i32
    return %arg0, %c0_i32 : i32, i32
  }
}

</mosaic_0001>

<llo_original>
// kernel: predictor_forward.1
$region0: #{predictor_forward.1}
  #allocation0 [shape = 'u32[]', space=smem, size = 0x4, offset = 0x4, fixed_abs, tag = 'smem constant byte address 0x4 - core index']
  #allocation1 [shape = 'u32[144,128]{1,0:T(1,128)}', space=vmem, size = 0x12000, scoped, tag = 'internal scratch']
  %s0 = inlined_call_operand.vmem [shape: f32[16,32], index: 0, kind: input, shape index: {}]
  %s1 = inlined_call_operand.vmem [shape: bf16[32,128], index: 1, kind: input, shape index: {}]
  %s2 = inlined_call_operand.vmem [shape: f32[1,128], index: 2, kind: input, shape index: {}]
  %s3 = inlined_call_operand.vmem [shape: bf16[128,64], index: 3, kind: input, shape index: {}]
  %s4 = inlined_call_operand.vmem [shape: f32[1,64], index: 4, kind: input, shape index: {}]
  %s5 = inlined_call_operand.vmem [shape: bf16[64,128], index: 5, kind: input, shape index: {}]
  %s6 = inlined_call_operand.vmem [shape: f32[1,2], index: 6, kind: input, shape index: {}]
  %s7 = inlined_call_operand.vmem [shape: f32[16,2], index: 7, kind: output, shape index: {}]
  %s8 = sld [smem:[#allocation0]]
  $region38: #{predictor_forward.1} parent=0
    _
  %s10 = ssub.s32 1, %s8
  %s11 = scalar_select 0, %s10, %s8
  // Predicated region
  $region2: #{predictor_forward.1} parent=0 // pred_check
    _
  $region3: #{predictor_forward.1} parent=0 // pred_check_branch
    %13 = sbr.rel (0) target = $region5
  $region4: #{predictor_forward.1} parent=0 // pred_region
    _
  $region5: #{predictor_forward.1} parent=0 // pred_fallthru
    _
  // Predicated region
  $region6: #{predictor_forward.1} parent=0 // pred_check
    _
  $region7: #{predictor_forward.1} parent=0 // pred_check_branch
    %15 = sbr.rel (0) target = $region9
  $region8: #{predictor_forward.1} parent=0 // pred_region
    _
  $region9: #{predictor_forward.1} parent=0 // pred_fallthru
    _
  // Predicated region
  $region10: #{predictor_forward.1} parent=0 // pred_check
    _
  $region11: #{predictor_forward.1} parent=0 // pred_check_branch
    %17 = sbr.rel (0) target = $region13
  $region12: #{predictor_forward.1} parent=0 // pred_region
    _
  $region13: #{predictor_forward.1} parent=0 // pred_fallthru
    _
  // Predicated region
  $region14: #{predictor_forward.1} parent=0 // pred_check
    _
  $region15: #{predictor_forward.1} parent=0 // pred_check_branch
    %19 = sbr.rel (0) target = $region17
  $region16: #{predictor_forward.1} parent=0 // pred_region
    _
  $region17: #{predictor_forward.1} parent=0 // pred_fallthru
    _
  // Predicated region
  $region18: #{predictor_forward.1} parent=0 // pred_check
    _
  $region19: #{predictor_forward.1} parent=0 // pred_check_branch
    %21 = sbr.rel (0) target = $region21
  $region20: #{predictor_forward.1} parent=0 // pred_region
    _
  $region21: #{predictor_forward.1} parent=0 // pred_fallthru
    _
  // Predicated region
  $region22: #{predictor_forward.1} parent=0 // pred_check
    _
  $region23: #{predictor_forward.1} parent=0 // pred_check_branch
    %23 = sbr.rel (0) target = $region25
  $region24: #{predictor_forward.1} parent=0 // pred_region
    _
  $region25: #{predictor_forward.1} parent=0 // pred_fallthru
    _
  // Predicated region
  $region26: #{predictor_forward.1} parent=0 // pred_check
    _
  $region27: #{predictor_forward.1} parent=0 // pred_check_branch
    %25 = sbr.rel (0) target = $region29
  $region28: #{predictor_forward.1} parent=0 // pred_region
    _
  $region29: #{predictor_forward.1} parent=0 // pred_fallthru
    _
  %v27 = vld [vmem:[%s0] sm:$0xff]
  %v28 = vld [vmem:[%s0 + $0x8] sm:$0xff]
  %v29 = vpack.c.bf16 %v28, %v27
  %v30 = vld [vmem:[%s1] sm:$0xf]
  %v31 = vld [vmem:[%s1 + $0x4] sm:$0xf]
  %v32 = vld [vmem:[%s1 + $0x8] sm:$0xf]
  %v33 = vld [vmem:[%s1 + $0xc] sm:$0xf]
  %v34 = vld [vmem:[%s2] sm:$0x1]
  %v36 = vlaneseq
  %v37 = vshrl.u32 %v36, 7
  %v38 = vsub.s32 0, %v37
  %v39 = vrot.slane %v34, %v38
  %v45 = vunpack.c.l.b16 %v30
  %v46 = vunpack.c.l.b16 %v31
  %v47 = vunpack.c.l.b16 %v32
  %v48 = vunpack.c.l.b16 %v33
  %v49 = vpack.c.b16 %v46, %v45
  %v50 = vpack.c.b16 %v48, %v47
  %vm53 = vcmask 261120
  %v55 = vsel %vm53, %v29, 0
  %57 = vmatprep.subr.bf16.mxu0 0
  %58 = vmatpush1.bf16.msra.mxu0 %v49
  %59 = vmatprep.subr.bf16.mxu0 0
  %60 = vmatpush1.bf16.msra.mxu0 %v50
  %61 = vmatprep.subr.bf16.mxu0 0
  %62 = vmatpush1.bf16.msra.mxu0 0
  %63 = vmatprep.subr.bf16.mxu0 0
  %64 = vmatpush1.bf16.msra.mxu0 0
  %65 = vmatprep.subr.bf16.mxu0 0
  %66 = vmatpush1.bf16.msra.mxu0 0
  %67 = vmatprep.subr.bf16.mxu0 0
  %68 = vmatpush1.bf16.msra.mxu0 0
  %69 = vmatprep.subr.bf16.mxu0 0
  %70 = vmatpush1.bf16.msra.mxu0 0
  %71 = vmatprep.subr.bf16.mxu0 0
  %72 = vmatpush1.bf16.msra.mxu0 0
  %73 = vmatprep.subr.bf16.mxu0 0
  %74 = vmatpush1.bf16.msra.mxu0 0
  %75 = vmatprep.subr.bf16.mxu0 0
  %76 = vmatpush1.bf16.msra.mxu0 0
  %77 = vmatprep.subr.bf16.mxu0 0
  %78 = vmatpush1.bf16.msra.mxu0 0
  %79 = vmatprep.subr.bf16.mxu0 0
  %80 = vmatpush1.bf16.msra.mxu0 0
  %81 = vmatprep.subr.bf16.mxu0 0
  %82 = vmatpush1.bf16.msra.mxu0 0
  %83 = vmatprep.subr.bf16.mxu0 0
  %84 = vmatpush1.bf16.msra.mxu0 0
  %85 = vmatprep.subr.bf16.mxu0 0
  %86 = vmatpush1.bf16.msra.mxu0 0
  %87 = vmatprep.subr.bf16.mxu0 0
  %88 = vmatpush1.bf16.msra.mxu0 0
  %89 = vmatprep.mubr.bf16.mxu0 0
  %90 = vmatmul.mubr.bf16.gmra.mrb[0].mxu0 %v55
  %v91 = vpop.f32.mrb[0].mxu0
  %v92 = vadd.f32 %v39, %v91
  %v93 = vpop.f32.mrb[0].mxu0
  %v94 = vpop.f32.mrb[0].mxu0
  %v95 = vadd.f32 %v39, %v94
  %v96 = vpop.f32.mrb[0].mxu0
  %97 = vdwg.mxu0
  %v98 = vmax.f32 %v92, 0.0
  %v99 = vmax.f32 %v95, 0.0
  %v100 = vpack.c.bf16 %v99, %v98
  %v101 = vld [vmem:[%s3] sm:$0xf]
  %v102 = vld [vmem:[%s3 + $0x4] sm:$0xf]
  %v103 = vld [vmem:[%s3 + $0x8] sm:$0xf]
  %v104 = vld [vmem:[%s3 + $0xc] sm:$0xf]
  %v105 = vld [vmem:[%s3 + $0x10] sm:$0xf]
  %v106 = vld [vmem:[%s3 + $0x14] sm:$0xf]
  %v107 = vld [vmem:[%s3 + $0x18] sm:$0xf]
  %v108 = vld [vmem:[%s3 + $0x1c] sm:$0xf]
  %v109 = vld [vmem:[%s3 + $0x20] sm:$0xf]
  %v110 = vld [vmem:[%s3 + $0x24] sm:$0xf]
  %v111 = vld [vmem:[%s3 + $0x28] sm:$0xf]
  %v112 = vld [vmem:[%s3 + $0x2c] sm:$0xf]
  %v113 = vld [vmem:[%s3 + $0x30] sm:$0xf]
  %v114 = vld [vmem:[%s3 + $0x34] sm:$0xf]
  %v115 = vld [vmem:[%s3 + $0x38] sm:$0xf]
  %v116 = vld [vmem:[%s3 + $0x3c] sm:$0xf]
  %v117 = vld [vmem:[%s4] sm:$0x1]
  %v119 = vlaneseq
  %v120 = vshrl.u32 %v119, 7
  %v121 = vsub.s32 0, %v120
  %v122 = vrot.slane %v117, %v121
  %v140 = vunpack.c.l.b16 %v101
  %v141 = vunpack.c.l.b16 %v102
  %v142 = vunpack.c.l.b16 %v103
  %v143 = vunpack.c.l.b16 %v104
  %v144 = vunpack.c.l.b16 %v105
  %v145 = vunpack.c.l.b16 %v106
  %v146 = vunpack.c.l.b16 %v107
  %v147 = vunpack.c.l.b16 %v108
  %v148 = vunpack.c.l.b16 %v109
  %v149 = vunpack.c.l.b16 %v110
  %v150 = vunpack.c.l.b16 %v111
  %v151 = vunpack.c.l.b16 %v112
  %v152 = vunpack.c.l.b16 %v113
  %v153 = vunpack.c.l.b16 %v114
  %v154 = vunpack.c.l.b16 %v115
  %v155 = vunpack.c.l.b16 %v116
  %v156 = vpack.c.b16 %v141, %v140
  %v157 = vpack.c.b16 %v143, %v142
  %v158 = vpack.c.b16 %v145, %v144
  %v159 = vpack.c.b16 %v147, %v146
  %v160 = vpack.c.b16 %v149, %v148
  %v161 = vpack.c.b16 %v151, %v150
  %v162 = vpack.c.b16 %v153, %v152
  %v163 = vpack.c.b16 %v155, %v154
  %172 = vmatprep.subr.bf16.mxu0 0
  %173 = vmatpush1.bf16.msra.mxu0 %v156
  %174 = vmatprep.subr.bf16.mxu0 0
  %175 = vmatpush1.bf16.msra.mxu0 %v157
  %176 = vmatprep.subr.bf16.mxu0 0
  %177 = vmatpush1.bf16.msra.mxu0 %v158
  %178 = vmatprep.subr.bf16.mxu0 0
  %179 = vmatpush1.bf16.msra.mxu0 %v159
  %180 = vmatprep.subr.bf16.mxu0 0
  %181 = vmatpush1.bf16.msra.mxu0 %v160
  %182 = vmatprep.subr.bf16.mxu0 0
  %183 = vmatpush1.bf16.msra.mxu0 %v161
  %184 = vmatprep.subr.bf16.mxu0 0
  %185 = vmatpush1.bf16.msra.mxu0 %v162
  %186 = vmatprep.subr.bf16.mxu0 0
  %187 = vmatpush1.bf16.msra.mxu0 %v163
  %188 = vmatprep.subr.bf16.mxu0 0
  %189 = vmatpush1.bf16.msra.mxu0 0
  %190 = vmatprep.subr.bf16.mxu0 0
  %191 = vmatpush1.bf16.msra.mxu0 0
  %192 = vmatprep.subr.bf16.mxu0 0
  %193 = vmatpush1.bf16.msra.mxu0 0
  %194 = vmatprep.subr.bf16.mxu0 0
  %195 = vmatpush1.bf16.msra.mxu0 0
  %196 = vmatprep.subr.bf16.mxu0 0
  %197 = vmatpush1.bf16.msra.mxu0 0
  %198 = vmatprep.subr.bf16.mxu0 0
  %199 = vmatpush1.bf16.msra.mxu0 0
  %200 = vmatprep.subr.bf16.mxu0 0
  %201 = vmatpush1.bf16.msra.mxu0 0
  %202 = vmatprep.subr.bf16.mxu0 0
  %203 = vmatpush1.bf16.msra.mxu0 0
  %204 = vmatprep.mubr.bf16.mxu0 0
  %205 = vmatmul.mubr.bf16.gmra.mrb[0].mxu0 %v100
  %v206 = vpop.f32.mrb[0].mxu0
  %v207 = vadd.f32 %v122, %v206
  %v208 = vpop.f32.mrb[0].mxu0
  %v209 = vpop.f32.mrb[0].mxu0
  %v210 = vadd.f32 %v122, %v209
  %v211 = vpop.f32.mrb[0].mxu0
  %212 = vdwg.mxu0
  %v213 = vmax.f32 %v207, 0.0
  %v214 = vmax.f32 %v210, 0.0
  %v215 = vpack.c.bf16 %v214, %v213
  %v216 = vld [vmem:[%s5] sm:$0xf]
  %v217 = vld [vmem:[%s5 + $0x4] sm:$0xf]
  %v218 = vld [vmem:[%s5 + $0x8] sm:$0xf]
  %v219 = vld [vmem:[%s5 + $0xc] sm:$0xf]
  %v220 = vld [vmem:[%s5 + $0x10] sm:$0xf]
  %v221 = vld [vmem:[%s5 + $0x14] sm:$0xf]
  %v222 = vld [vmem:[%s5 + $0x18] sm:$0xf]
  %v223 = vld [vmem:[%s5 + $0x1c] sm:$0xf]
  %v232 = vunpack.c.l.b16 %v216
  %v233 = vunpack.c.l.b16 %v217
  %v234 = vunpack.c.l.b16 %v218
  %v235 = vunpack.c.l.b16 %v219
  %v236 = vunpack.c.l.b16 %v220
  %v237 = vunpack.c.l.b16 %v221
  %v238 = vunpack.c.l.b16 %v222
  %v239 = vunpack.c.l.b16 %v223
  %v240 = vpack.c.b16 %v233, %v232
  %v241 = vpack.c.b16 %v235, %v234
  %v242 = vpack.c.b16 %v237, %v236
  %v243 = vpack.c.b16 %v239, %v238
  %vm248 = vcmask 523264
  %v250 = vsel %vm248, %v215, 0
  %252 = vmatprep.subr.bf16.mxu0 0
  %253 = vmatpush1.bf16.msra.mxu0 %v240
  %254 = vmatprep.subr.bf16.mxu0 0
  %255 = vmatpush1.bf16.msra.mxu0 %v241
  %256 = vmatprep.subr.bf16.mxu0 0
  %257 = vmatpush1.bf16.msra.mxu0 %v242
  %258 = vmatprep.subr.bf16.mxu0 0
  %259 = vmatpush1.bf16.msra.mxu0 %v243
  %260 = vmatprep.subr.bf16.mxu0 0
  %261 = vmatpush1.bf16.msra.mxu0 0
  %262 = vmatprep.subr.bf16.mxu0 0
  %263 = vmatpush1.bf16.msra.mxu0 0
  %264 = vmatprep.subr.bf16.mxu0 0
  %265 = vmatpush1.bf16.msra.mxu0 0
  %266 = vmatprep.subr.bf16.mxu0 0
  %267 = vmatpush1.bf16.msra.mxu0 0
  %268 = vmatprep.subr.bf16.mxu0 0
  %269 = vmatpush1.bf16.msra.mxu0 0
  %270 = vmatprep.subr.bf16.mxu0 0
  %271 = vmatpush1.bf16.msra.mxu0 0
  %272 = vmatprep.subr.bf16.mxu0 0
  %273 = vmatpush1.bf16.msra.mxu0 0
  %274 = vmatprep.subr.bf16.mxu0 0
  %275 = vmatpush1.bf16.msra.mxu0 0
  %276 = vmatprep.subr.bf16.mxu0 0
  %277 = vmatpush1.bf16.msra.mxu0 0
  %278 = vmatprep.subr.bf16.mxu0 0
  %279 = vmatpush1.bf16.msra.mxu0 0
  %280 = vmatprep.subr.bf16.mxu0 0
  %281 = vmatpush1.bf16.msra.mxu0 0
  %282 = vmatprep.subr.bf16.mxu0 0
  %283 = vmatpush1.bf16.msra.mxu0 0
  %284 = vmatprep.mubr.bf16.mxu0 0
  %285 = vmatmul.mubr.bf16.gmra.mrb[0].mxu0 %v250
  %v286 = vpop.f32.mrb[0].mxu0
  %v287 = vadd.f32 0.0, %v286
  %v288 = vpop.f32.mrb[0].mxu0
  %v289 = vpop.f32.mrb[0].mxu0
  %v290 = vadd.f32 0.0, %v289
  %v291 = vpop.f32.mrb[0].mxu0
  %292 = vdwg.mxu0
  %v293 = vld [vmem:[%s6] sm:$0x1]
  %v295 = vlaneseq
  %v296 = vshrl.u32 %v295, 7
  %v297 = vsub.s32 0, %v296
  %v298 = vrot.slane %v293, %v297
  %v300 = vadd.f32 %v287, %v298
  %v301 = vadd.f32 %v290, %v298
  %vm302 = vcmask 15360
  %v303 = vsel %vm302, %v300, -inf
  %304 = vmax.xlane.f32.xlu0 %v303
  %v305 = vpop.xlane.xlu0 %304
  %v306 = vsel %vm302, %v301, -inf
  %307 = vmax.xlane.f32.xlu0 %v306
  %v308 = vpop.xlane.xlu0 %307
  %v309 = vsub.f32 %v300, %v305
  %v310 = vsub.f32 %v301, %v308
  %v311 = vmul.f32 %v309, 1.442695
  %v312 = vpow.pop %v311
  %v313 = vmul.f32 %v310, 1.442695
  %v314 = vpow.pop %v313
  %v315 = vsel %vm302, %v312, 0.0
  %316 = vadd.xlane.f32.xlu0 %v315
  %v317 = vpop.xlane.xlu0 %316
  %v318 = vsel %vm302, %v314, 0.0
  %319 = vadd.xlane.f32.xlu0 %v318
  %v320 = vpop.xlane.xlu0 %319
  %v321 = vlog2.pop %v317
  %v322 = vmul.f32 %v321, 0.6931472
  %v323 = vlog2.pop %v320
  %v324 = vmul.f32 %v323, 0.6931472
  %v325 = vsub.f32 %v309, %v322
  %v326 = vsub.f32 %v310, %v324
  %327 = vst.msk [vmem:[%s7] sm:$0xff] %vm302, %v325
  %328 = vst.msk [vmem:[%s7 + $0x8] sm:$0xff] %vm302, %v326
  // Predicated region
  $region30: #{predictor_forward.1} parent=0 // pred_check
    _
  $region31: #{predictor_forward.1} parent=0 // pred_check_branch
    %330 = sbr.rel (0) target = $region33
  $region32: #{predictor_forward.1} parent=0 // pred_region
    _
  $region33: #{predictor_forward.1} parent=0 // pred_fallthru
    _
  // Predicated region
  $region34: #{predictor_forward.1} parent=0 // pred_check
    _
  $region35: #{predictor_forward.1} parent=0 // pred_check_branch
    %332 = sbr.rel (0) target = $region37
  $region36: #{predictor_forward.1} parent=0 // pred_region
    _
  $region37: #{predictor_forward.1} parent=0 // pred_fallthru
    _

</llo_original>
